<compile_context>
chip_gen: v5e
topology: v5e:2x2
jax: 0.10.0
libtpu: 0.0.40
codegen_flags: <defaults>
</compile_context>

<pallas_src>
import functools
import math

import jax
import jax.numpy as jnp
from jax.experimental import pallas as pl
from jax.experimental.pallas import tpu as pltpu


def _pick_tile(dim: int, preferred: int, align: int):
    """Largest multiple of `align` that divides `dim` and is <= min(dim, preferred).

    Returns None if no such tile exists.
    """
    best = None
    limit = min(dim, preferred)
    t = align
    while t <= limit:
        if dim % t == 0:
            best = t
        t += align
    return best


def _pick_lane_tile(dim: int, preferred: int) -> int:
    """Lane-dim tile: prefer 256-aligned (v6e/v7x MXU is 2x256^2), fall back to
    128-aligned, else the full dim (single block)."""
    for align in (256, 128):
        t = _pick_tile(dim, preferred, align)
        if t is not None:
            return t
    return dim


def _vmem_footprint_bytes(tm: int, tn: int, tk: int) -> int:
    """Approximate VMEM footprint of the pipelined kernel at these tiles."""
    lhs = 2 * (2 * tm) * tk * 2          # packed bf16 LHS, double-buffered
    a_panels = 2 * 2 * tk * tn * 2       # Ar + Ai bf16 panels, double-buffered
    outs = 2 * 2 * tm * tn * 4           # yr + yi f32 tiles, double-buffered
    accs = 2 * (2 * tm) * tn * 4         # f32 accumulators (scratch)
    return lhs + a_panels + outs + accs


# Keep the tiled working set comfortably inside v7x's 64 MiB physical VMEM
# (and the 32 MiB default scoped limit on v5e/v6e/v7x) with ~2x headroom.
_VMEM_TILE_BUDGET = 24 * 1024 * 1024


def _select_tiles(M_pad: int, N: int, K: int, max_tm: int, max_tn: int, max_tk: int):
    tm = _pick_tile(M_pad, max(max_tm, 16), 16)
    if tm is None:
        tm = M_pad
    gm = M_pad // tm

    # v7x has 2 TensorCores; dimension_semantics can only shard if the
    # parallel grid has >= 2 points. With gm == 1 (common: small B*C), cap tn
    # so gn >= 2 — each core then streams disjoint A columns (no duplicated
    # HBM traffic).
    eff_max_tn = max_tn
    if gm == 1 and N >= 256:
        eff_max_tn = min(max_tn, N // 2)
    tn = _pick_lane_tile(N, eff_max_tn)

    tk = _pick_lane_tile(K, max_tk)

    # Shrink tk (then tn) until the double-buffered footprint fits the budget.
    while _vmem_footprint_bytes(tm, tn, tk) > _VMEM_TILE_BUDGET and tk > 128:
        tk = _pick_lane_tile(K, tk // 2)
    while _vmem_footprint_bytes(tm, tn, tk) > _VMEM_TILE_BUDGET and tn > 128:
        tn = _pick_lane_tile(N, tn // 2)
    return tm, tn, tk


def _conj_transpose_kernel(lhs_ref, ar_ref, ai_ref,
                           yr_ref, yi_ref, acc_r_ref, acc_i_ref):
    """Tiled y = x @ conj(A) in split real/imag form with pre-packed LHS rows.

    lhs_ref : [2*tm, tk] bf16, rows 0..tm-1 = xr tile, rows tm..2tm-1 = xi tile
    ar_ref, ai_ref : [tk, tn] bf16 panels of Re(A), Im(A)
    """
    k = pl.program_id(2)

    @pl.when(k == 0)
    def _init():
        acc_r_ref[...] = jnp.zeros_like(acc_r_ref)
        acc_i_ref[...] = jnp.zeros_like(acc_i_ref)

    lhs = lhs_ref[...]
    # Each A panel is pushed through the MXU exactly once per K-step.
    acc_r_ref[...] += jnp.dot(lhs, ar_ref[...],
                              preferred_element_type=jnp.float32)
    acc_i_ref[...] += jnp.dot(lhs, ai_ref[...],
                              preferred_element_type=jnp.float32)

    @pl.when(k == pl.num_programs(2) - 1)
    def _finalize():
        tm = yr_ref.shape[0]
        pr = acc_r_ref[...]        # [xr@Ar ; xi@Ar]
        pi = acc_i_ref[...]        # [xr@Ai ; xi@Ai]
        # y = x @ conj(A):  yr = xr@Ar + xi@Ai ,  yi = xi@Ar - xr@Ai
        yr_ref[...] = pr[:tm, :] + pi[tm:, :]
        yi_ref[...] = pr[tm:, :] - pi[:tm, :]


def prepare_operator(A):
    """Split the complex base matrix A [N_out, N_in] ONCE (outside the hot path,
    cacheable across calls) into bf16 real/imag panels, consumed by the kernel
    in their native layout — no transpose copy is ever made."""
    # TODO(synk): optional int8 (v5e/v6e) or fp8-e4m3 (v7x) panels with
    # per-column scales to halve the dominant A HBM stream again.
    ar = jnp.real(A).astype(jnp.bfloat16)
    ai = jnp.imag(A).astype(jnp.bfloat16)
    return ar, ai


@functools.partial(jax.jit,
                   static_argnames=("input_shape", "max_tm", "max_tn", "max_tk"))
def conjugate_transpose_forward(x, ar, ai, *, input_shape,
                                max_tm=128, max_tn=512, max_tk=2048):
    """ConjugateTransposeLinearSystem.forward: y = conj(A^T @ conj(x)) = A^H x.

    x : complex64 [B, C, *output_shape]   (base operator OUTPUT space)
    ar, ai : bf16 [N_out, N_in]           (from prepare_operator; native layout)
    returns complex64 [B, C, *input_shape]
    """
    B, C = x.shape[0], x.shape[1]
    out_spatial = x.shape[2:]
    K = math.prod(out_spatial)              # = N_out (contraction dim)
    N = ar.shape[1]                         # = N_in
    assert ar.shape == ai.shape
    assert ar.shape[0] == K, "prod(x spatial dims) must equal N_out of A"
    assert math.prod(input_shape) == N, "prod(input_shape) must equal N_in of A"
    # Lane alignment keeps all DMAs / stores unmasked and full-width.
    assert K % 128 == 0 and N % 128 == 0, "flattened dims must be multiples of 128"
    # TODO(synk): zero-pad K/N (and A) for operators whose flattened dims are not
    # multiples of 128 instead of asserting.

    M = B * C
    # bf16 vregs pack [16,128] — round rows to 16 so LHS loads stay unmasked.
    M_pad = max(16, ((M + 15) // 16) * 16)

    tm, tn, tk = _select_tiles(M_pad, N, K, max_tm, max_tn, max_tk)
    gm, gn, gk = M_pad // tm, N // tn, K // tk

    xr = jnp.real(x).reshape(M, K).astype(jnp.bfloat16)
    xi = jnp.imag(x).reshape(M, K).astype(jnp.bfloat16)
    if M_pad != M:
        pad = ((0, M_pad - M), (0, 0))
        xr = jnp.pad(xr, pad)
        xi = jnp.pad(xi, pad)

    # Pre-pack the LHS once in the wrapper: [gm, 2*tm, K] where each M-block is
    # a contiguous [xr_tile ; xi_tile] slab. The kernel never concatenates.
    lhs = jnp.concatenate(
        [xr.reshape(gm, tm, K), xi.reshape(gm, tm, K)], axis=1)   # [gm, 2*tm, K]

    fp = _vmem_footprint_bytes(tm, tn, tk)
    vmem_limit = int(min(max(2 * fp, 32 * 1024 * 1024), 48 * 1024 * 1024))

    cost = pl.CostEstimate(
        flops=8 * M_pad * K * N,                       # two [2M,K]x[K,N] dots
        transcendentals=0,
        bytes_accessed=(2 * M_pad * K * 2) * gn        # packed LHS (bf16), per N-tile
                       + (2 * K * N * 2) * gm          # Ar/Ai (bf16), per M-tile
                       + 2 * M_pad * N * 4,            # yr/yi (f32)
    )

    yr, yi = pl.pallas_call(
        _conj_transpose_kernel,
        out_shape=(
            jax.ShapeDtypeStruct((M_pad, N), jnp.float32),
            jax.ShapeDtypeStruct((M_pad, N), jnp.float32),
        ),
        grid=(gm, gn, gk),
        in_specs=[
            # packed [xr ; xi] slab for M-block i (leading dim squeezed away)
            pl.BlockSpec((None, 2 * tm, tk), lambda i, j, k: (i, 0, k)),
            pl.BlockSpec((tk, tn), lambda i, j, k: (k, j)),   # Ar
            pl.BlockSpec((tk, tn), lambda i, j, k: (k, j)),   # Ai
        ],
        out_specs=[
            pl.BlockSpec((tm, tn), lambda i, j, k: (i, j)),   # yr
            pl.BlockSpec((tm, tn), lambda i, j, k: (i, j)),   # yi
        ],
        scratch_shapes=[
            pltpu.VMEM((2 * tm, tn), jnp.float32),
            pltpu.VMEM((2 * tm, tn), jnp.float32),
        ],
        compiler_params=pltpu.CompilerParams(
            dimension_semantics=("parallel", "parallel", "arbitrary"),
            vmem_limit_bytes=vmem_limit,
        ),
        cost_estimate=cost,
    )(lhs, ar, ai)

    y = (yr[:M] + 1j * yi[:M]).astype(jnp.complex64)
    return y.reshape(B, C, *input_shape)


def conjugate_transpose_linear_system_forward(x, A, input_shape=None, **tiles):
    """Convenience wrapper mirroring the module API (splits A every call)."""
    if input_shape is None:
        input_shape = tuple(x.shape[2:])
    ar, ai = prepare_operator(A)
    return conjugate_transpose_forward(x, ar, ai, input_shape=tuple(input_shape),
                                       **tiles)


if __name__ == "__main__":
    key = jax.random.PRNGKey(0)
    k1, k2, k3, k4 = jax.random.split(key, 4)

    # x lives in the base operator's OUTPUT space; result lives in its INPUT space.
    B, C, H, W = 2, 4, 16, 16
    out_spatial = (H, W)
    in_spatial = (16, 16)
    N_out = H * W
    N_in = in_spatial[0] * in_spatial[1]

    x = (jax.random.normal(k1, (B, C, H, W), jnp.float32)
         + 1j * jax.random.normal(k2, (B, C, H, W), jnp.float32)).astype(jnp.complex64)
    A = ((jax.random.normal(k3, (N_out, N_in), jnp.float32)
          + 1j * jax.random.normal(k4, (N_out, N_in), jnp.float32))
         / jnp.sqrt(N_in)).astype(jnp.complex64)

    # Split / quantize the operator once, outside the hot path (cacheable).
    ar, ai = prepare_operator(A)

    # Small preferred tiles so the demo exercises the full (M, N, K) grid +
    # accumulator init/finalize path; defaults (512 / 2048) are for production.
    y = conjugate_transpose_forward(x, ar, ai, input_shape=in_spatial,
                                    max_tm=128, max_tn=128, max_tk=128)
    y = jax.block_until_ready(y)

    # --- references ---
    x_flat = x.reshape(B * C, N_out)

    # Exact module semantics: forward(x) = conj(A^T @ conj(x)) = x_flat @ conj(A).
    y_exact = jnp.conjugate(jnp.conjugate(x_flat) @ A).reshape(B, C, *in_spatial)

    # Same math on the bf16-quantized inputs the kernel actually consumes
    # (isolates kernel correctness from the deliberate bf16 weight quantization).
    hp = jax.lax.Precision.HIGHEST
    xr_q = jnp.real(x_flat).astype(jnp.bfloat16).astype(jnp.float32)
    xi_q = jnp.imag(x_flat).astype(jnp.bfloat16).astype(jnp.float32)
    ar_q = ar.astype(jnp.float32)
    ai_q = ai.astype(jnp.float32)
    yr_q = jnp.dot(xr_q, ar_q, precision=hp) + jnp.dot(xi_q, ai_q, precision=hp)
    yi_q = jnp.dot(xi_q, ar_q, precision=hp) - jnp.dot(xr_q, ai_q, precision=hp)
    y_quant = (yr_q + 1j * yi_q).reshape(B, C, *in_spatial)

    err_kernel = jnp.max(jnp.abs(y - y_quant))
    assert err_kernel < 1e-2, f"kernel mismatch vs quantized reference: {err_kernel}"

    scale = jnp.max(jnp.abs(y_exact))
    err_total = float(jnp.max(jnp.abs(y - y_exact)) / scale)
    assert err_total < 5e-2, f"kernel mismatch vs exact complex reference: {err_total}"

    print("KERNEL_OK")
</pallas_src>

<mosaic_0001>
module attributes {stable_mosaic.version = 11 : i64} {
  func.func @_conj_transpose_kernel(%arg0: i32, %arg1: i32, %arg2: i32, %arg3: memref<1x32x128xbf16, #tpu.memory_space<vmem>>, %arg4: memref<128x128xbf16, #tpu.memory_space<vmem>>, %arg5: memref<128x128xbf16, #tpu.memory_space<vmem>>, %arg6: memref<16x128xf32, #tpu.memory_space<vmem>>, %arg7: memref<16x128xf32, #tpu.memory_space<vmem>>, %arg8: memref<32x128xf32, #tpu.memory_space<vmem>>, %arg9: memref<32x128xf32, #tpu.memory_space<vmem>>) attributes {dimension_semantics = [#tpu.dimension_semantics<parallel>, #tpu.dimension_semantics<parallel>, #tpu.dimension_semantics<arbitrary>], iteration_bounds = array<i64: 1, 2, 2>, scalar_prefetch = 0 : i64, scratch_operands = 2 : i64, tpu.core_type = #tpu.core_type<tc>, window_params = [{transform_indices = @transform_0, window_bounds = array<i64: 1, 32, 128>}, {transform_indices = @transform_1, window_bounds = array<i64: 128, 128>}, {transform_indices = @transform_2, window_bounds = array<i64: 128, 128>}, {transform_indices = @transform_3, window_bounds = array<i64: 16, 128>}, {transform_indices = @transform_4, window_bounds = array<i64: 16, 128>}]} {
    %c0_i32 = arith.constant 0 : i32
    %0 = arith.cmpi eq, %arg2, %c0_i32 : i32
    %1 = arith.extui %0 : i1 to i32
    %c0_i32_0 = arith.constant 0 : i32
    %2 = arith.cmpi ne, %1, %c0_i32_0 : i32
    scf.if %2 {
      %cst_17 = arith.constant 0.000000e+00 : f32
      %18 = vector.broadcast %cst_17 : f32 to vector<32x128xf32>
      %c0_18 = arith.constant 0 : index
      %c0_19 = arith.constant 0 : index
      %19 = vector.load %arg8[%c0_18, %c0_19] : memref<32x128xf32, #tpu.memory_space<vmem>>, vector<32x128xf32>
      tpu.vector_store %arg8[%c0_18, %c0_19], %18 {strides = array<i32>} : memref<32x128xf32, #tpu.memory_space<vmem>>, vector<32x128xf32>,
      %cst_20 = arith.constant 0.000000e+00 : f32
      %20 = vector.broadcast %cst_20 : f32 to vector<32x128xf32>
      %c0_21 = arith.constant 0 : index
      %c0_22 = arith.constant 0 : index
      %21 = vector.load %arg9[%c0_21, %c0_22] : memref<32x128xf32, #tpu.memory_space<vmem>>, vector<32x128xf32>
      tpu.vector_store %arg9[%c0_21, %c0_22], %20 {strides = array<i32>} : memref<32x128xf32, #tpu.memory_space<vmem>>, vector<32x128xf32>,
    } else {
    }
    %c0 = arith.constant 0 : index
    %c0_1 = arith.constant 0 : index
    %c0_2 = arith.constant 0 : index
    %3 = vector.load %arg3[%c0, %c0_1, %c0_2] : memref<1x32x128xbf16, #tpu.memory_space<vmem>>, vector<1x32x128xbf16>
    %4 = vector.shape_cast %3 : vector<1x32x128xbf16> to vector<32x128xbf16>
    %c0_3 = arith.constant 0 : index
    %c0_4 = arith.constant 0 : index
    %5 = vector.load %arg8[%c0_3, %c0_4] : memref<32x128xf32, #tpu.memory_space<vmem>>, vector<32x128xf32>
    %c0_5 = arith.constant 0 : index
    %c0_6 = arith.constant 0 : index
    %6 = vector.load %arg4[%c0_5, %c0_6] : memref<128x128xbf16, #tpu.memory_space<vmem>>, vector<128x128xbf16>
    %cst = arith.constant dense<0.000000e+00> : vector<32x128xf32>
    %7 = tpu.matmul %4, %6, %cst {dimension_numbers = #tpu.dot_dimension_numbers<[1], [0], [0], [1], [0, 0, 1, 1], [], []>} : vector<32x128xbf16>, vector<128x128xbf16>, vector<32x128xf32> -> vector<32x128xf32>
    %8 = arith.addf %5, %7 : vector<32x128xf32>
    %c0_7 = arith.constant 0 : index
    %c0_8 = arith.constant 0 : index
    %9 = vector.load %arg8[%c0_7, %c0_8] : memref<32x128xf32, #tpu.memory_space<vmem>>, vector<32x128xf32>
    tpu.vector_store %arg8[%c0_7, %c0_8], %8 {strides = array<i32>} : memref<32x128xf32, #tpu.memory_space<vmem>>, vector<32x128xf32>,
    %c0_9 = arith.constant 0 : index
    %c0_10 = arith.constant 0 : index
    %10 = vector.load %arg9[%c0_9, %c0_10] : memref<32x128xf32, #tpu.memory_space<vmem>>, vector<32x128xf32>
    %c0_11 = arith.constant 0 : index
    %c0_12 = arith.constant 0 : index
    %11 = vector.load %arg5[%c0_11, %c0_12] : memref<128x128xbf16, #tpu.memory_space<vmem>>, vector<128x128xbf16>
    %cst_13 = arith.constant dense<0.000000e+00> : vector<32x128xf32>
    %12 = tpu.matmul %4, %11, %cst_13 {dimension_numbers = #tpu.dot_dimension_numbers<[1], [0], [0], [1], [0, 0, 1, 1], [], []>} : vector<32x128xbf16>, vector<128x128xbf16>, vector<32x128xf32> -> vector<32x128xf32>
    %13 = arith.addf %10, %12 : vector<32x128xf32>
    %c0_14 = arith.constant 0 : index
    %c0_15 = arith.constant 0 : index
    %14 = vector.load %arg9[%c0_14, %c0_15] : memref<32x128xf32, #tpu.memory_space<vmem>>, vector<32x128xf32>
    tpu.vector_store %arg9[%c0_14, %c0_15], %13 {strides = array<i32>} : memref<32x128xf32, #tpu.memory_space<vmem>>, vector<32x128xf32>,
    %c1_i32 = arith.constant 1 : i32
    %15 = arith.cmpi eq, %arg2, %c1_i32 : i32
    %16 = arith.extui %15 : i1 to i32
    %c0_i32_16 = arith.constant 0 : i32
    %17 = arith.cmpi ne, %16, %c0_i32_16 : i32
    scf.if %17 {
      %c0_17 = arith.constant 0 : index
      %c0_18 = arith.constant 0 : index
      %18 = vector.load %arg8[%c0_17, %c0_18] : memref<32x128xf32, #tpu.memory_space<vmem>>, vector<32x128xf32>
      %c0_19 = arith.constant 0 : index
      %c0_20 = arith.constant 0 : index
      %19 = vector.load %arg9[%c0_19, %c0_20] : memref<32x128xf32, #tpu.memory_space<vmem>>, vector<32x128xf32>
      %20 = vector.extract_strided_slice %18 {offsets = [0, 0], sizes = [16, 128], strides = [1, 1]} : vector<32x128xf32> to vector<16x128xf32>
      %21 = vector.extract_strided_slice %19 {offsets = [16, 0], sizes = [16, 128], strides = [1, 1]} : vector<32x128xf32> to vector<16x128xf32>
      %22 = arith.addf %20, %21 : vector<16x128xf32>
      %c0_21 = arith.constant 0 : index
      %c0_22 = arith.constant 0 : index
      %23 = vector.load %arg6[%c0_21, %c0_22] : memref<16x128xf32, #tpu.memory_space<vmem>>, vector<16x128xf32>
      tpu.vector_store %arg6[%c0_21, %c0_22], %22 {strides = array<i32>} : memref<16x128xf32, #tpu.memory_space<vmem>>, vector<16x128xf32>,
      %24 = vector.extract_strided_slice %18 {offsets = [16, 0], sizes = [16, 128], strides = [1, 1]} : vector<32x128xf32> to vector<16x128xf32>
      %25 = vector.extract_strided_slice %19 {offsets = [0, 0], sizes = [16, 128], strides = [1, 1]} : vector<32x128xf32> to vector<16x128xf32>
      %26 = arith.subf %24, %25 : vector<16x128xf32>
      %c0_23 = arith.constant 0 : index
      %c0_24 = arith.constant 0 : index
      %27 = vector.load %arg7[%c0_23, %c0_24] : memref<16x128xf32, #tpu.memory_space<vmem>>, vector<16x128xf32>
      tpu.vector_store %arg7[%c0_23, %c0_24], %26 {strides = array<i32>} : memref<16x128xf32, #tpu.memory_space<vmem>>, vector<16x128xf32>,
    } else {
    }
    return
  }
  func.func @transform_0(%arg0: i32, %arg1: i32, %arg2: i32) -> (i32, i32, i32) {
    %c0_i32 = arith.constant 0 : i32
    %c0_i32_0 = arith.constant 0 : i32
    return %arg0, %c0_i32, %arg2 : i32, i32, i32
  }
  func.func @transform_1(%arg0: i32, %arg1: i32, %arg2: i32) -> (i32, i32) {
    %c0_i32 = arith.constant 0 : i32
    return %arg2, %arg1 : i32, i32
  }
  func.func @transform_2(%arg0: i32, %arg1: i32, %arg2: i32) -> (i32, i32) {
    %c0_i32 = arith.constant 0 : i32
    return %arg2, %arg1 : i32, i32
  }
  func.func @transform_3(%arg0: i32, %arg1: i32, %arg2: i32) -> (i32, i32) {
    %c0_i32 = arith.constant 0 : i32
    return %arg0, %arg1 : i32, i32
  }
  func.func @transform_4(%arg0: i32, %arg1: i32, %arg2: i32) -> (i32, i32) {
    %c0_i32 = arith.constant 0 : i32
    return %arg0, %arg1 : i32, i32
  }
}

</mosaic_0001>

<llo_original>
// kernel: custom-call.1
$region0: #{custom-call.1}
  %s0 = inlined_call_operand.hbm [shape: c64[2,4,16,16], index: 0, kind: input, shape index: {}]
  %s1 = inlined_call_operand.vmem [shape: f32[2,4,16,16], index: 1, kind: output, shape index: {}]
  %s2 = scalar_lea.hbm %s0, 128
  $region1: #{custom-call.1} parent=0
    #allocation0 [shape = 's32[1]{0}', space=sflag, size = 0x4, scoped, tag = 'scoped memory for custom-call.1']
    %3 = vsyncpa [#allocation0], 0
    %s5 = sshll.u32 %s2, 4
    %s6 = int_to_ptr.hbm [resolvable:$true] %s5
    %s7 = sshll.u32 %s1, 4
    %s8 = int_to_ptr.vmem [resolvable:$true] %s7
    %10 = dma.hbm_to_vmem [thread:$0]  %s6, 2048, %s8, [#allocation0]
    %12 = dma.done [#allocation0], 2048
    %13 = vsyncpa [#allocation0], 1

// kernel: custom-call
$region0: #{custom-call}
  %s0 = inlined_call_operand.hbm [shape: c64[2,4,16,16], index: 0, kind: input, shape index: {}]
  %s1 = inlined_call_operand.vmem [shape: f32[2,4,16,16], index: 1, kind: output, shape index: {}]
  $region1: #{custom-call} parent=0
    #allocation0 [shape = 's32[1]{0}', space=sflag, size = 0x4, scoped, tag = 'scoped memory for custom-call']
    %2 = vsyncpa [#allocation0], 0
    %s4 = sshll.u32 %s0, 4
    %s5 = int_to_ptr.hbm [resolvable:$true] %s4
    %s6 = sshll.u32 %s1, 4
    %s7 = int_to_ptr.vmem [resolvable:$true] %s6
    %9 = dma.hbm_to_vmem [thread:$0]  %s5, 2048, %s7, [#allocation0]
    %11 = dma.done [#allocation0], 2048
    %12 = vsyncpa [#allocation0], 1

// kernel: custom-call.2
$region0: #{custom-call.2}
  %s0 = inlined_call_operand.vmem [shape: f32[2,4,16,16], index: 0, kind: input, shape index: {}]
  %s1 = inlined_call_operand.vmem [shape: f32[2,4,16,16], index: 1, kind: input, shape index: {}]
  %s2 = inlined_call_operand.hbm [shape: c64[2,4,16,16], index: 2, kind: output, shape index: {}]
  %s3 = scalar_lea.hbm %s2, 128
  $region1: #{custom-call.2} parent=0
    #allocation0 [shape = 's32[1]{0}', space=sflag, size = 0x4, scoped, tag = 'scoped memory for custom-call.2']
    %4 = vsyncpa [#allocation0], 0
    %s6 = sshll.u32 %s0, 4
    %s7 = int_to_ptr.vmem [resolvable:$true] %s6
    %s8 = sshll.u32 %s2, 4
    %s9 = int_to_ptr.hbm [resolvable:$true] %s8
    %11 = dma.vmem_to_hbm [thread:$0]  %s7, 2048, %s9, [#allocation0]
    %13 = dma.done [#allocation0], 2048
    %14 = vsyncpa [#allocation0], 1
  $region2: #{custom-call.2} parent=0
    #allocation1 [shape = 's32[1]{0}', space=sflag, size = 0x4, scoped, tag = 'scoped memory for custom-call.2']
    %15 = vsyncpa [#allocation1], 0
    %s17 = sshll.u32 %s1, 4
    %s18 = int_to_ptr.vmem [resolvable:$true] %s17
    %s19 = sshll.u32 %s3, 4
    %s20 = int_to_ptr.hbm [resolvable:$true] %s19
    %22 = dma.vmem_to_hbm [thread:$0]  %s18, 2048, %s20, [#allocation1]
    %24 = dma.done [#allocation1], 2048
    %25 = vsyncpa [#allocation1], 1

// kernel: conjugate_transpose_forward.1
$region0: #{conjugate_transpose_forward.1}
  #allocation0 [shape = 'u32[]', space=smem, size = 0x4, offset = 0x4, fixed_abs, tag = 'smem constant byte address 0x4 - core index']
  #allocation1 [shape = 'u32[72,128]{1,0:T(1,128)}', space=vmem, size = 0x9000, scoped, tag = 'internal scratch']
  #allocation2 [shape = 'f32[32,128]{1,0:T(8,128)}', space=vmem, size = 0x4000, scoped, tag = 'scratch operand']
  #allocation3 [shape = 'f32[32,128]{1,0:T(8,128)}', space=vmem, size = 0x4000, scoped, tag = 'scratch operand']
  %s0 = inlined_call_operand.vmem [shape: bf16[1,32,256], index: 0, kind: input, shape index: {}]
  %s1 = inlined_call_operand.vmem [shape: bf16[256,256], index: 1, kind: input, shape index: {}]
  %s2 = inlined_call_operand.vmem [shape: bf16[256,256], index: 2, kind: input, shape index: {}]
  %s3 = inlined_call_operand.vmem [shape: f32[16,256], index: 3, kind: output, shape index: {0}]
  %s4 = inlined_call_operand.vmem [shape: f32[16,256], index: 4, kind: output, shape index: {1}]
  %5 = xla_tuple %s3, %s4
  %s6 = sld [smem:[#allocation0]]
  $region252: #{conjugate_transpose_forward.1} parent=0
    _
  %s8 = ssub.s32 1, %s6
  %s9 = scalar_select 0, %s8, %s6
  $region1: #{conjugate_transpose_forward.1} parent=0
    #allocation4 [shape = 'u8[16384]{0}', space=vmem, size = 0x4000, scoped, tag = 'input window, operand 0']
    #allocation5 [shape = 'u8[65536]{0}', space=vmem, size = 0x10000, scoped, tag = 'input window, operand 1']
    #allocation6 [shape = 'u8[65536]{0}', space=vmem, size = 0x10000, scoped, tag = 'input window, operand 2']
    #allocation7 [shape = 'u8[16384]{0}', space=vmem, size = 0x4000, scoped, tag = 'output window, operand 0']
    #allocation8 [shape = 'u8[16384]{0}', space=vmem, size = 0x4000, scoped, tag = 'output window, operand 1']
    loop: start=0, step=1, limit=6
    $region2: #{conjugate_transpose_forward.1} parent=1 // loop_pre_header
      _
    $region3: #{conjugate_transpose_forward.1} parent=1 // loop_header
      %s11 = sphi 0, %s15
      %p12 = scmp.ge.s32.totalorder %s11, 6
      %s18 = sphi 0, %s37
      %s19 = sphi 0, %s33
      %s20 = sphi 0, %s29
      %s21 = sphi 0, %s18
      %s22 = sphi 0, %s19
      %s23 = sphi 0, %s20
      %s24 = sphi 0, %s21
      %s25 = sphi 0, %s22
      %s26 = sphi 0, %s23
      %s42 = sphi 0, %s44
      %s45 = sphi 0, %s42
      %s46 = sphi 0, %s45
      %s62 = sphi 0, %s46
      %s70 = sphi 0, %s72
      %s73 = sphi 0, %s70
      %s74 = sphi 0, %s73
      %s90 = sphi 0, %s74
      %s98 = sphi 0, %s100
      %s101 = sphi 0, %s98
      %s102 = sphi 0, %s101
      %s118 = sphi 0, %s102
      %s126 = sphi 0, %s128
      %s129 = sphi 0, %s126
      %s130 = sphi 0, %s129
      %s146 = sphi 0, %s130
      %s154 = sphi 0, %s156
      %s157 = sphi 0, %s154
      %s158 = sphi 0, %s157
      %s174 = sphi 0, %s158
    $region4: #{conjugate_transpose_forward.1} parent=1 // loop_header_branch
      %14 = sbr.rel (%p12) target = $region8
    $region5: #{conjugate_transpose_forward.1} parent=1 // loop_body
      %s16 = ssub.s32 %s11, 1
      %s17 = ssub.s32 %s11, 2
      %s27 = sadd.s32 1, %s20
      %p28 = scmp.ge.s32.totalorder %s27, 2
      %s29 = scalar_select %p28, 0, %s27
      %s30 = sadd.s32 1, %s19
      %s31 = scalar_select %p28, %s30, %s19
      %p32 = scmp.ge.s32.totalorder %s31, 2
      %s33 = scalar_select %p32, 0, %s31
      %s34 = sadd.s32 1, %s18
      %s35 = scalar_select %p32, %s34, %s18
      %p36 = scmp.ge.s32.totalorder %s35, 1
      %s37 = scalar_select %p36, 0, %s35
      %s38 = ssub.s32 %s18, %s37
      %s39 = ssub.s32 %s20, %s29
      %s40 = sor.u32 %s38, %s39
      %p41 = scmp.eq.s32.totalorder %s40, 0
      %s43 = sadd.s32 %s42, 1
      %s44 = scalar_select %p41, %s42, %s43
      %p47 = pneg %p41
      %p48 = scmp.eq.s32.totalorder %s11, 3
      %p49 = por %p47, %p48
      %p50 = scmp.ne.s32.totalorder %s42, %s45
      %p51 = scmp.eq.s32.totalorder %s11, 0
      %p52 = por %p50, %p51
      %p53 = scmp.ne.s32.totalorder %s42, %s45
      %p54 = scmp.eq.s32.totalorder %s16, 3
      %p55 = por %p53, %p54
      %p56 = scmp.ne.s32.totalorder %s45, %s46
      %p57 = scmp.eq.s32.totalorder %s16, 0
      %p58 = por %p56, %p57
      %p59 = scmp.ne.s32.totalorder %s45, %s46
      %p60 = scmp.eq.s32.totalorder %s17, 3
      %p61 = por %p59, %p60
      %p63 = scmp.ne.s32.totalorder %s46, %s62
      %p64 = scmp.eq.s32.totalorder %s17, 0
      %p65 = por %p63, %p64
      %s66 = ssub.s32 %s20, %s29
      %s67 = ssub.s32 %s19, %s33
      %s68 = sor.u32 %s66, %s67
      %p69 = scmp.eq.s32.totalorder %s68, 0
      %s71 = sadd.s32 %s70, 1
      %s72 = scalar_select %p69, %s70, %s71
      %p75 = pneg %p69
      %p76 = scmp.eq.s32.totalorder %s11, 3
      %p77 = por %p75, %p76
      %p78 = scmp.ne.s32.totalorder %s70, %s73
      %p79 = scmp.eq.s32.totalorder %s11, 0
      %p80 = por %p78, %p79
      %p81 = scmp.ne.s32.totalorder %s70, %s73
      %p82 = scmp.eq.s32.totalorder %s16, 3
      %p83 = por %p81, %p82
      %p84 = scmp.ne.s32.totalorder %s73, %s74
      %p85 = scmp.eq.s32.totalorder %s16, 0
      %p86 = por %p84, %p85
      %p87 = scmp.ne.s32.totalorder %s73, %s74
      %p88 = scmp.eq.s32.totalorder %s17, 3
      %p89 = por %p87, %p88
      %p91 = scmp.ne.s32.totalorder %s74, %s90
      %p92 = scmp.eq.s32.totalorder %s17, 0
      %p93 = por %p91, %p92
      %s94 = ssub.s32 %s20, %s29
      %s95 = ssub.s32 %s19, %s33
      %s96 = sor.u32 %s94, %s95
      %p97 = scmp.eq.s32.totalorder %s96, 0
      %s99 = sadd.s32 %s98, 1
      %s100 = scalar_select %p97, %s98, %s99
      %p103 = pneg %p97
      %p104 = scmp.eq.s32.totalorder %s11, 3
      %p105 = por %p103, %p104
      %p106 = scmp.ne.s32.totalorder %s98, %s101
      %p107 = scmp.eq.s32.totalorder %s11, 0
      %p108 = por %p106, %p107
      %p109 = scmp.ne.s32.totalorder %s98, %s101
      %p110 = scmp.eq.s32.totalorder %s16, 3
      %p111 = por %p109, %p110
      %p112 = scmp.ne.s32.totalorder %s101, %s102
      %p113 = scmp.eq.s32.totalorder %s16, 0
      %p114 = por %p112, %p113
      %p115 = scmp.ne.s32.totalorder %s101, %s102
      %p116 = scmp.eq.s32.totalorder %s17, 3
      %p117 = por %p115, %p116
      %p119 = scmp.ne.s32.totalorder %s102, %s118
      %p120 = scmp.eq.s32.totalorder %s17, 0
      %p121 = por %p119, %p120
      %s122 = ssub.s32 %s18, %s37
      %s123 = ssub.s32 %s19, %s33
      %s124 = sor.u32 %s122, %s123
      %p125 = scmp.eq.s32.totalorder %s124, 0
      %s127 = sadd.s32 %s126, 1
      %s128 = scalar_select %p125, %s126, %s127
      %p131 = pneg %p125
      %p132 = scmp.eq.s32.totalorder %s11, 3
      %p133 = por %p131, %p132
      %p134 = scmp.ne.s32.totalorder %s126, %s129
      %p135 = scmp.eq.s32.totalorder %s11, 0
      %p136 = por %p134, %p135
      %p137 = scmp.ne.s32.totalorder %s126, %s129
      %p138 = scmp.eq.s32.totalorder %s16, 3
      %p139 = por %p137, %p138
      %p140 = scmp.ne.s32.totalorder %s129, %s130
      %p141 = scmp.eq.s32.totalorder %s16, 0
      %p142 = por %p140, %p141
      %p143 = scmp.ne.s32.totalorder %s129, %s130
      %p144 = scmp.eq.s32.totalorder %s17, 3
      %p145 = por %p143, %p144
      %p147 = scmp.ne.s32.totalorder %s130, %s146
      %p148 = scmp.eq.s32.totalorder %s17, 0
      %p149 = por %p147, %p148
      %s150 = ssub.s32 %s18, %s37
      %s151 = ssub.s32 %s19, %s33
      %s152 = sor.u32 %s150, %s151
      %p153 = scmp.eq.s32.totalorder %s152, 0
      %s155 = sadd.s32 %s154, 1
      %s156 = scalar_select %p153, %s154, %s155
      %p159 = pneg %p153
      %p160 = scmp.eq.s32.totalorder %s11, 3
      %p161 = por %p159, %p160
      %p162 = scmp.ne.s32.totalorder %s154, %s157
      %p163 = scmp.eq.s32.totalorder %s11, 0
      %p164 = por %p162, %p163
      %p165 = scmp.ne.s32.totalorder %s154, %s157
      %p166 = scmp.eq.s32.totalorder %s16, 3
      %p167 = por %p165, %p166
      %p168 = scmp.ne.s32.totalorder %s157, %s158
      %p169 = scmp.eq.s32.totalorder %s16, 0
      %p170 = por %p168, %p169
      %p171 = scmp.ne.s32.totalorder %s157, %s158
      %p172 = scmp.eq.s32.totalorder %s17, 3
      %p173 = por %p171, %p172
      %p175 = scmp.ne.s32.totalorder %s158, %s174
      %p176 = scmp.eq.s32.totalorder %s17, 0
      %p177 = por %p175, %p176
      %p178 = scmp.le.s32.totalorder 1, %s11
      %p179 = scmp.lt.s32.totalorder %s11, 5
      %p180 = pnand %p178, %p179
      %p181 = pneg %p180
      // Predicated region
      $region9: #{conjugate_transpose_forward.1} parent=5 // pred_check
        _
      $region10: #{conjugate_transpose_forward.1} parent=5 // pred_check_branch
        %183 = sbr.rel (%p180) target = $region12
      $region11: #{conjugate_transpose_forward.1} parent=5 // pred_region
        %s184 = ssub.s32 %s11, 1
      $region12: #{conjugate_transpose_forward.1} parent=5 // pred_fallthru
        _
      %p185 = scmp.lt.s32.totalorder %s11, 4
      // Predicated region
      $region13: #{conjugate_transpose_forward.1} parent=5 // pred_check
        %p186 = pneg %p185
      $region14: #{conjugate_transpose_forward.1} parent=5 // pred_check_branch
        %188 = sbr.rel (%p186) target = $region16
      $region15: #{conjugate_transpose_forward.1} parent=5 // pred_region
        // Predicated region
        $region17: #{conjugate_transpose_forward.1} parent=15 // pred_check
          %p189 = pneg %p52
        $region18: #{conjugate_transpose_forward.1} parent=15 // pred_check_branch
          %191 = sbr.rel (%p189) target = $region20
        $region19: #{conjugate_transpose_forward.1} parent=15 // pred_region
          %s192 = sand.u32 %s42, 1
          %s193 = sand.u32 %s42, 1
          %s194 = smul.addr %s193, 16
          %s195 = scalar_lea.vmem [#allocation4], %s194
          %s196 = smul.addr %s18, 8
          %s197 = sadd.s32 %s20, %s196
          %s198 = smul.addr %s197, 4
          %s199 = scalar_lea.vmem %s0, %s198
          // Predicated region
          $region21: #{conjugate_transpose_forward.1} parent=19 // pred_check
            _
          $region22: #{conjugate_transpose_forward.1} parent=19 // pred_check_branch
            %201 = sbr.rel (0) target = $region24
          $region23: #{conjugate_transpose_forward.1} parent=19 // pred_region
            // Predicated region
            $region25: #{conjugate_transpose_forward.1} parent=23 // pred_check
              _
            $region26: #{conjugate_transpose_forward.1} parent=23 // pred_check_branch
              %203 = sbr.rel target = $region28
            $region27: #{conjugate_transpose_forward.1} parent=23 // pred_region
              // Predicated region
              $region40: #{conjugate_transpose_forward.1} parent=27 // pred_check
                _
              $region41: #{conjugate_transpose_forward.1} parent=27 // pred_check_branch
                %225 = sbr.rel (0) target = $region43
              $region42: #{conjugate_transpose_forward.1} parent=27 // pred_region
                loop: start=0, step=1, limit=1
                $region44: #{conjugate_transpose_forward.1} parent=42 // loop_pre_header
                  _
                $region45: #{conjugate_transpose_forward.1} parent=42 // loop_header
                  %s227 = sphi 0, %s231
                  %p228 = scmp.ge.s32.totalorder %s227, 1
                  %s232 = sphi %s199, %s199
                  %s233 = sphi %s195, %s195
                $region46: #{conjugate_transpose_forward.1} parent=42 // loop_header_branch
                  %230 = sbr.rel (%p228) target = $region50
                $region47: #{conjugate_transpose_forward.1} parent=42 // loop_body
                  _
                $region48: #{conjugate_transpose_forward.1} parent=42 // loop_footer
                  %s231 = sadd.s32 1, %s227
                $region49: #{conjugate_transpose_forward.1} parent=42 // loop_footer_branch
                  %226 = sbr.rel target = $region45
                $region50: #{conjugate_transpose_forward.1} parent=42 // loop_exit
                  _
                %s235 = ssub.s32 16, 1
                loop: start=0, step=1, limit=1
                $region51: #{conjugate_transpose_forward.1} parent=42 // loop_pre_header
                  _
                $region52: #{conjugate_transpose_forward.1} parent=42 // loop_header
                  %s237 = sphi 0, %s241
                  %p238 = scmp.ge.s32.totalorder %s237, 1
                  %s242 = sphi %s199, %s199
                  %s243 = sphi %s195, %s195
                $region53: #{conjugate_transpose_forward.1} parent=42 // loop_header_branch
                  %240 = sbr.rel (%p238) target = $region57
                $region54: #{conjugate_transpose_forward.1} parent=42 // loop_body
                  %v244 = vld [vmem:[%s242] sm:%s235]
                  %245 = vst [vmem:[%s243] sm:%s235] %v244
                  %v246 = vld [vmem:[%s242 + $0x8] sm:%s235]
                  %247 = vst [vmem:[%s243 + $0x4] sm:%s235] %v246
                  %v248 = vld [vmem:[%s242 + $0x10] sm:%s235]
                  %249 = vst [vmem:[%s243 + $0x8] sm:%s235] %v248
                  %v250 = vld [vmem:[%s242 + $0x18] sm:%s235]
                  %251 = vst [vmem:[%s243 + $0xc] sm:%s235] %v250
                $region55: #{conjugate_transpose_forward.1} parent=42 // loop_footer
                  %s241 = sadd.s32 1, %s237
                $region56: #{conjugate_transpose_forward.1} parent=42 // loop_footer_branch
                  %236 = sbr.rel target = $region52
                $region57: #{conjugate_transpose_forward.1} parent=42 // loop_exit
                  _
              $region43: #{conjugate_transpose_forward.1} parent=27 // pred_fallthru
                _
            $region28: #{conjugate_transpose_forward.1} parent=23 // pred_fallthru
              _
            // Predicated region
            $region29: #{conjugate_transpose_forward.1} parent=23 // pred_check
              _
            $region30: #{conjugate_transpose_forward.1} parent=23 // pred_check_branch
              %205 = sbr.rel (0) target = $region32
            $region31: #{conjugate_transpose_forward.1} parent=23 // pred_region
              %s207 = ssub.s32 16, 1
              loop: start=0, step=1, limit=1
              $region33: #{conjugate_transpose_forward.1} parent=31 // loop_pre_header
                _
              $region34: #{conjugate_transpose_forward.1} parent=31 // loop_header
                %s209 = sphi 0, %s213
                %p210 = scmp.ge.s32.totalorder %s209, 1
                %s214 = sphi %s199, %s199
                %s215 = sphi %s195, %s195
              $region35: #{conjugate_transpose_forward.1} parent=31 // loop_header_branch
                %212 = sbr.rel (%p210) target = $region39
              $region36: #{conjugate_transpose_forward.1} parent=31 // loop_body
                %v216 = vld [vmem:[%s214] sm:%s207]
                %217 = vst [vmem:[%s215] sm:%s207] %v216
                %v218 = vld [vmem:[%s214 + $0x8] sm:%s207]
                %219 = vst [vmem:[%s215 + $0x4] sm:%s207] %v218
                %v220 = vld [vmem:[%s214 + $0x10] sm:%s207]
                %221 = vst [vmem:[%s215 + $0x8] sm:%s207] %v220
                %v222 = vld [vmem:[%s214 + $0x18] sm:%s207]
                %223 = vst [vmem:[%s215 + $0xc] sm:%s207] %v222
              $region37: #{conjugate_transpose_forward.1} parent=31 // loop_footer
                %s213 = sadd.s32 1, %s209
              $region38: #{conjugate_transpose_forward.1} parent=31 // loop_footer_branch
                %208 = sbr.rel target = $region34
              $region39: #{conjugate_transpose_forward.1} parent=31 // loop_exit
                _
            $region32: #{conjugate_transpose_forward.1} parent=23 // pred_fallthru
              _
          $region24: #{conjugate_transpose_forward.1} parent=19 // pred_fallthru
            _
          %252 = vnop
        $region20: #{conjugate_transpose_forward.1} parent=15 // pred_fallthru
          _
        // Predicated region
        $region58: #{conjugate_transpose_forward.1} parent=15 // pred_check
          %p253 = pneg %p80
        $region59: #{conjugate_transpose_forward.1} parent=15 // pred_check_branch
          %255 = sbr.rel (%p253) target = $region61
        $region60: #{conjugate_transpose_forward.1} parent=15 // pred_region
          %s256 = sand.u32 %s70, 1
          %s257 = sand.u32 %s70, 1
          %s258 = smul.addr %s257, 64
          %s259 = scalar_lea.vmem [#allocation5], %s258
          %s260 = smul.u32 16, %s20
          %s261 = smul.addr %s260, 2
          %s262 = sadd.s32 %s19, %s261
          %s263 = smul.addr %s262, 4
          %s264 = scalar_lea.vmem %s1, %s263
          // Predicated region
          $region62: #{conjugate_transpose_forward.1} parent=60 // pred_check
            _
          $region63: #{conjugate_transpose_forward.1} parent=60 // pred_check_branch
            %266 = sbr.rel (0) target = $region65
          $region64: #{conjugate_transpose_forward.1} parent=60 // pred_region
            // Predicated region
            $region66: #{conjugate_transpose_forward.1} parent=64 // pred_check
              _
            $region67: #{conjugate_transpose_forward.1} parent=64 // pred_check_branch
              %268 = sbr.rel target = $region69
            $region68: #{conjugate_transpose_forward.1} parent=64 // pred_region
              // Predicated region
              $region81: #{conjugate_transpose_forward.1} parent=68 // pred_check
                _
              $region82: #{conjugate_transpose_forward.1} parent=68 // pred_check_branch
                %314 = sbr.rel (0) target = $region84
              $region83: #{conjugate_transpose_forward.1} parent=68 // pred_region
                loop: start=0, step=1, limit=1
                $region85: #{conjugate_transpose_forward.1} parent=83 // loop_pre_header
                  _
                $region86: #{conjugate_transpose_forward.1} parent=83 // loop_header
                  %s316 = sphi 0, %s320
                  %p317 = scmp.ge.s32.totalorder %s316, 1
                  %s321 = sphi %s264, %s264
                  %s322 = sphi %s259, %s259
                $region87: #{conjugate_transpose_forward.1} parent=83 // loop_header_branch
                  %319 = sbr.rel (%p317) target = $region91
                $region88: #{conjugate_transpose_forward.1} parent=83 // loop_body
                  _
                $region89: #{conjugate_transpose_forward.1} parent=83 // loop_footer
                  %s320 = sadd.s32 1, %s316
                $region90: #{conjugate_transpose_forward.1} parent=83 // loop_footer_branch
                  %315 = sbr.rel target = $region86
                $region91: #{conjugate_transpose_forward.1} parent=83 // loop_exit
                  _
                %s324 = ssub.s32 16, 1
                loop: start=0, step=1, limit=1
                $region92: #{conjugate_transpose_forward.1} parent=83 // loop_pre_header
                  _
                $region93: #{conjugate_transpose_forward.1} parent=83 // loop_header
                  %s326 = sphi 0, %s330
                  %p327 = scmp.ge.s32.totalorder %s326, 1
                  %s331 = sphi %s264, %s264
                  %s332 = sphi %s259, %s259
                $region94: #{conjugate_transpose_forward.1} parent=83 // loop_header_branch
                  %329 = sbr.rel (%p327) target = $region98
                $region95: #{conjugate_transpose_forward.1} parent=83 // loop_body
                  %v333 = vld [vmem:[%s331] sm:%s324]
                  %334 = vst [vmem:[%s332] sm:%s324] %v333
                  %v335 = vld [vmem:[%s331 + $0x8] sm:%s324]
                  %336 = vst [vmem:[%s332 + $0x4] sm:%s324] %v335
                  %v337 = vld [vmem:[%s331 + $0x10] sm:%s324]
                  %338 = vst [vmem:[%s332 + $0x8] sm:%s324] %v337
                  %v339 = vld [vmem:[%s331 + $0x18] sm:%s324]
                  %340 = vst [vmem:[%s332 + $0xc] sm:%s324] %v339
                  %v341 = vld [vmem:[%s331 + $0x20] sm:%s324]
                  %342 = vst [vmem:[%s332 + $0x10] sm:%s324] %v341
                  %v343 = vld [vmem:[%s331 + $0x28] sm:%s324]
                  %344 = vst [vmem:[%s332 + $0x14] sm:%s324] %v343
                  %v345 = vld [vmem:[%s331 + $0x30] sm:%s324]
                  %346 = vst [vmem:[%s332 + $0x18] sm:%s324] %v345
                  %v347 = vld [vmem:[%s331 + $0x38] sm:%s324]
                  %348 = vst [vmem:[%s332 + $0x1c] sm:%s324] %v347
                  %v349 = vld [vmem:[%s331 + $0x40] sm:%s324]
                  %350 = vst [vmem:[%s332 + $0x20] sm:%s324] %v349
                  %v351 = vld [vmem:[%s331 + $0x48] sm:%s324]
                  %352 = vst [vmem:[%s332 + $0x24] sm:%s324] %v351
                  %v353 = vld [vmem:[%s331 + $0x50] sm:%s324]
                  %354 = vst [vmem:[%s332 + $0x28] sm:%s324] %v353
                  %v355 = vld [vmem:[%s331 + $0x58] sm:%s324]
                  %356 = vst [vmem:[%s332 + $0x2c] sm:%s324] %v355
                  %v357 = vld [vmem:[%s331 + $0x60] sm:%s324]
                  %358 = vst [vmem:[%s332 + $0x30] sm:%s324] %v357
                  %v359 = vld [vmem:[%s331 + $0x68] sm:%s324]
                  %360 = vst [vmem:[%s332 + $0x34] sm:%s324] %v359
                  %v361 = vld [vmem:[%s331 + $0x70] sm:%s324]
                  %362 = vst [vmem:[%s332 + $0x38] sm:%s324] %v361
                  %v363 = vld [vmem:[%s331 + $0x78] sm:%s324]
                  %364 = vst [vmem:[%s332 + $0x3c] sm:%s324] %v363
                $region96: #{conjugate_transpose_forward.1} parent=83 // loop_footer
                  %s330 = sadd.s32 1, %s326
                $region97: #{conjugate_transpose_forward.1} parent=83 // loop_footer_branch
                  %325 = sbr.rel target = $region93
                $region98: #{conjugate_transpose_forward.1} parent=83 // loop_exit
                  _
              $region84: #{conjugate_transpose_forward.1} parent=68 // pred_fallthru
                _
            $region69: #{conjugate_transpose_forward.1} parent=64 // pred_fallthru
              _
            // Predicated region
            $region70: #{conjugate_transpose_forward.1} parent=64 // pred_check
              _
            $region71: #{conjugate_transpose_forward.1} parent=64 // pred_check_branch
              %270 = sbr.rel (0) target = $region73
            $region72: #{conjugate_transpose_forward.1} parent=64 // pred_region
              %s272 = ssub.s32 16, 1
              loop: start=0, step=1, limit=1
              $region74: #{conjugate_transpose_forward.1} parent=72 // loop_pre_header
                _
              $region75: #{conjugate_transpose_forward.1} parent=72 // loop_header
                %s274 = sphi 0, %s278
                %p275 = scmp.ge.s32.totalorder %s274, 1
                %s279 = sphi %s264, %s264
                %s280 = sphi %s259, %s259
              $region76: #{conjugate_transpose_forward.1} parent=72 // loop_header_branch
                %277 = sbr.rel (%p275) target = $region80
              $region77: #{conjugate_transpose_forward.1} parent=72 // loop_body
                %v281 = vld [vmem:[%s279] sm:%s272]
                %282 = vst [vmem:[%s280] sm:%s272] %v281
                %v283 = vld [vmem:[%s279 + $0x8] sm:%s272]
                %284 = vst [vmem:[%s280 + $0x4] sm:%s272] %v283
                %v285 = vld [vmem:[%s279 + $0x10] sm:%s272]
                %286 = vst [vmem:[%s280 + $0x8] sm:%s272] %v285
                %v287 = vld [vmem:[%s279 + $0x18] sm:%s272]
                %288 = vst [vmem:[%s280 + $0xc] sm:%s272] %v287
                %v289 = vld [vmem:[%s279 + $0x20] sm:%s272]
                %290 = vst [vmem:[%s280 + $0x10] sm:%s272] %v289
                %v291 = vld [vmem:[%s279 + $0x28] sm:%s272]
                %292 = vst [vmem:[%s280 + $0x14] sm:%s272] %v291
                %v293 = vld [vmem:[%s279 + $0x30] sm:%s272]
                %294 = vst [vmem:[%s280 + $0x18] sm:%s272] %v293
                %v295 = vld [vmem:[%s279 + $0x38] sm:%s272]
                %296 = vst [vmem:[%s280 + $0x1c] sm:%s272] %v295
                %v297 = vld [vmem:[%s279 + $0x40] sm:%s272]
                %298 = vst [vmem:[%s280 + $0x20] sm:%s272] %v297
                %v299 = vld [vmem:[%s279 + $0x48] sm:%s272]
                %300 = vst [vmem:[%s280 + $0x24] sm:%s272] %v299
                %v301 = vld [vmem:[%s279 + $0x50] sm:%s272]
                %302 = vst [vmem:[%s280 + $0x28] sm:%s272] %v301
                %v303 = vld [vmem:[%s279 + $0x58] sm:%s272]
                %304 = vst [vmem:[%s280 + $0x2c] sm:%s272] %v303
                %v305 = vld [vmem:[%s279 + $0x60] sm:%s272]
                %306 = vst [vmem:[%s280 + $0x30] sm:%s272] %v305
                %v307 = vld [vmem:[%s279 + $0x68] sm:%s272]
                %308 = vst [vmem:[%s280 + $0x34] sm:%s272] %v307
                %v309 = vld [vmem:[%s279 + $0x70] sm:%s272]
                %310 = vst [vmem:[%s280 + $0x38] sm:%s272] %v309
                %v311 = vld [vmem:[%s279 + $0x78] sm:%s272]
                %312 = vst [vmem:[%s280 + $0x3c] sm:%s272] %v311
              $region78: #{conjugate_transpose_forward.1} parent=72 // loop_footer
                %s278 = sadd.s32 1, %s274
              $region79: #{conjugate_transpose_forward.1} parent=72 // loop_footer_branch
                %273 = sbr.rel target = $region75
              $region80: #{conjugate_transpose_forward.1} parent=72 // loop_exit
                _
            $region73: #{conjugate_transpose_forward.1} parent=64 // pred_fallthru
              _
          $region65: #{conjugate_transpose_forward.1} parent=60 // pred_fallthru
            _
          %365 = vnop
        $region61: #{conjugate_transpose_forward.1} parent=15 // pred_fallthru
          _
        // Predicated region
        $region99: #{conjugate_transpose_forward.1} parent=15 // pred_check
          %p366 = pneg %p108
        $region100: #{conjugate_transpose_forward.1} parent=15 // pred_check_branch
          %368 = sbr.rel (%p366) target = $region102
        $region101: #{conjugate_transpose_forward.1} parent=15 // pred_region
          %s369 = sand.u32 %s98, 1
          %s370 = sand.u32 %s98, 1
          %s371 = smul.addr %s370, 64
          %s372 = scalar_lea.vmem [#allocation6], %s371
          %s373 = smul.u32 16, %s20
          %s374 = smul.addr %s373, 2
          %s375 = sadd.s32 %s19, %s374
          %s376 = smul.addr %s375, 4
          %s377 = scalar_lea.vmem %s2, %s376
          // Predicated region
          $region103: #{conjugate_transpose_forward.1} parent=101 // pred_check
            _
          $region104: #{conjugate_transpose_forward.1} parent=101 // pred_check_branch
            %379 = sbr.rel (0) target = $region106
          $region105: #{conjugate_transpose_forward.1} parent=101 // pred_region
            // Predicated region
            $region107: #{conjugate_transpose_forward.1} parent=105 // pred_check
              _
            $region108: #{conjugate_transpose_forward.1} parent=105 // pred_check_branch
              %381 = sbr.rel target = $region110
            $region109: #{conjugate_transpose_forward.1} parent=105 // pred_region
              // Predicated region
              $region122: #{conjugate_transpose_forward.1} parent=109 // pred_check
                _
              $region123: #{conjugate_transpose_forward.1} parent=109 // pred_check_branch
                %427 = sbr.rel (0) target = $region125
              $region124: #{conjugate_transpose_forward.1} parent=109 // pred_region
                loop: start=0, step=1, limit=1
                $region126: #{conjugate_transpose_forward.1} parent=124 // loop_pre_header
                  _
                $region127: #{conjugate_transpose_forward.1} parent=124 // loop_header
                  %s429 = sphi 0, %s433
                  %p430 = scmp.ge.s32.totalorder %s429, 1
                  %s434 = sphi %s377, %s377
                  %s435 = sphi %s372, %s372
                $region128: #{conjugate_transpose_forward.1} parent=124 // loop_header_branch
                  %432 = sbr.rel (%p430) target = $region132
                $region129: #{conjugate_transpose_forward.1} parent=124 // loop_body
                  _
                $region130: #{conjugate_transpose_forward.1} parent=124 // loop_footer
                  %s433 = sadd.s32 1, %s429
                $region131: #{conjugate_transpose_forward.1} parent=124 // loop_footer_branch
                  %428 = sbr.rel target = $region127
                $region132: #{conjugate_transpose_forward.1} parent=124 // loop_exit
                  _
                %s437 = ssub.s32 16, 1
                loop: start=0, step=1, limit=1
                $region133: #{conjugate_transpose_forward.1} parent=124 // loop_pre_header
                  _
                $region134: #{conjugate_transpose_forward.1} parent=124 // loop_header
                  %s439 = sphi 0, %s443
                  %p440 = scmp.ge.s32.totalorder %s439, 1
                  %s444 = sphi %s377, %s377
                  %s445 = sphi %s372, %s372
                $region135: #{conjugate_transpose_forward.1} parent=124 // loop_header_branch
                  %442 = sbr.rel (%p440) target = $region139
                $region136: #{conjugate_transpose_forward.1} parent=124 // loop_body
                  %v446 = vld [vmem:[%s444] sm:%s437]
                  %447 = vst [vmem:[%s445] sm:%s437] %v446
                  %v448 = vld [vmem:[%s444 + $0x8] sm:%s437]
                  %449 = vst [vmem:[%s445 + $0x4] sm:%s437] %v448
                  %v450 = vld [vmem:[%s444 + $0x10] sm:%s437]
                  %451 = vst [vmem:[%s445 + $0x8] sm:%s437] %v450
                  %v452 = vld [vmem:[%s444 + $0x18] sm:%s437]
                  %453 = vst [vmem:[%s445 + $0xc] sm:%s437] %v452
                  %v454 = vld [vmem:[%s444 + $0x20] sm:%s437]
                  %455 = vst [vmem:[%s445 + $0x10] sm:%s437] %v454
                  %v456 = vld [vmem:[%s444 + $0x28] sm:%s437]
                  %457 = vst [vmem:[%s445 + $0x14] sm:%s437] %v456
                  %v458 = vld [vmem:[%s444 + $0x30] sm:%s437]
                  %459 = vst [vmem:[%s445 + $0x18] sm:%s437] %v458
                  %v460 = vld [vmem:[%s444 + $0x38] sm:%s437]
                  %461 = vst [vmem:[%s445 + $0x1c] sm:%s437] %v460
                  %v462 = vld [vmem:[%s444 + $0x40] sm:%s437]
                  %463 = vst [vmem:[%s445 + $0x20] sm:%s437] %v462
                  %v464 = vld [vmem:[%s444 + $0x48] sm:%s437]
                  %465 = vst [vmem:[%s445 + $0x24] sm:%s437] %v464
                  %v466 = vld [vmem:[%s444 + $0x50] sm:%s437]
                  %467 = vst [vmem:[%s445 + $0x28] sm:%s437] %v466
                  %v468 = vld [vmem:[%s444 + $0x58] sm:%s437]
                  %469 = vst [vmem:[%s445 + $0x2c] sm:%s437] %v468
                  %v470 = vld [vmem:[%s444 + $0x60] sm:%s437]
                  %471 = vst [vmem:[%s445 + $0x30] sm:%s437] %v470
                  %v472 = vld [vmem:[%s444 + $0x68] sm:%s437]
                  %473 = vst [vmem:[%s445 + $0x34] sm:%s437] %v472
                  %v474 = vld [vmem:[%s444 + $0x70] sm:%s437]
                  %475 = vst [vmem:[%s445 + $0x38] sm:%s437] %v474
                  %v476 = vld [vmem:[%s444 + $0x78] sm:%s437]
                  %477 = vst [vmem:[%s445 + $0x3c] sm:%s437] %v476
                $region137: #{conjugate_transpose_forward.1} parent=124 // loop_footer
                  %s443 = sadd.s32 1, %s439
                $region138: #{conjugate_transpose_forward.1} parent=124 // loop_footer_branch
                  %438 = sbr.rel target = $region134
                $region139: #{conjugate_transpose_forward.1} parent=124 // loop_exit
                  _
              $region125: #{conjugate_transpose_forward.1} parent=109 // pred_fallthru
                _
            $region110: #{conjugate_transpose_forward.1} parent=105 // pred_fallthru
              _
            // Predicated region
            $region111: #{conjugate_transpose_forward.1} parent=105 // pred_check
              _
            $region112: #{conjugate_transpose_forward.1} parent=105 // pred_check_branch
              %383 = sbr.rel (0) target = $region114
            $region113: #{conjugate_transpose_forward.1} parent=105 // pred_region
              %s385 = ssub.s32 16, 1
              loop: start=0, step=1, limit=1
              $region115: #{conjugate_transpose_forward.1} parent=113 // loop_pre_header
                _
              $region116: #{conjugate_transpose_forward.1} parent=113 // loop_header
                %s387 = sphi 0, %s391
                %p388 = scmp.ge.s32.totalorder %s387, 1
                %s392 = sphi %s377, %s377
                %s393 = sphi %s372, %s372
              $region117: #{conjugate_transpose_forward.1} parent=113 // loop_header_branch
                %390 = sbr.rel (%p388) target = $region121
              $region118: #{conjugate_transpose_forward.1} parent=113 // loop_body
                %v394 = vld [vmem:[%s392] sm:%s385]
                %395 = vst [vmem:[%s393] sm:%s385] %v394
                %v396 = vld [vmem:[%s392 + $0x8] sm:%s385]
                %397 = vst [vmem:[%s393 + $0x4] sm:%s385] %v396
                %v398 = vld [vmem:[%s392 + $0x10] sm:%s385]
                %399 = vst [vmem:[%s393 + $0x8] sm:%s385] %v398
                %v400 = vld [vmem:[%s392 + $0x18] sm:%s385]
                %401 = vst [vmem:[%s393 + $0xc] sm:%s385] %v400
                %v402 = vld [vmem:[%s392 + $0x20] sm:%s385]
                %403 = vst [vmem:[%s393 + $0x10] sm:%s385] %v402
                %v404 = vld [vmem:[%s392 + $0x28] sm:%s385]
                %405 = vst [vmem:[%s393 + $0x14] sm:%s385] %v404
                %v406 = vld [vmem:[%s392 + $0x30] sm:%s385]
                %407 = vst [vmem:[%s393 + $0x18] sm:%s385] %v406
                %v408 = vld [vmem:[%s392 + $0x38] sm:%s385]
                %409 = vst [vmem:[%s393 + $0x1c] sm:%s385] %v408
                %v410 = vld [vmem:[%s392 + $0x40] sm:%s385]
                %411 = vst [vmem:[%s393 + $0x20] sm:%s385] %v410
                %v412 = vld [vmem:[%s392 + $0x48] sm:%s385]
                %413 = vst [vmem:[%s393 + $0x24] sm:%s385] %v412
                %v414 = vld [vmem:[%s392 + $0x50] sm:%s385]
                %415 = vst [vmem:[%s393 + $0x28] sm:%s385] %v414
                %v416 = vld [vmem:[%s392 + $0x58] sm:%s385]
                %417 = vst [vmem:[%s393 + $0x2c] sm:%s385] %v416
                %v418 = vld [vmem:[%s392 + $0x60] sm:%s385]
                %419 = vst [vmem:[%s393 + $0x30] sm:%s385] %v418
                %v420 = vld [vmem:[%s392 + $0x68] sm:%s385]
                %421 = vst [vmem:[%s393 + $0x34] sm:%s385] %v420
                %v422 = vld [vmem:[%s392 + $0x70] sm:%s385]
                %423 = vst [vmem:[%s393 + $0x38] sm:%s385] %v422
                %v424 = vld [vmem:[%s392 + $0x78] sm:%s385]
                %425 = vst [vmem:[%s393 + $0x3c] sm:%s385] %v424
              $region119: #{conjugate_transpose_forward.1} parent=113 // loop_footer
                %s391 = sadd.s32 1, %s387
              $region120: #{conjugate_transpose_forward.1} parent=113 // loop_footer_branch
                %386 = sbr.rel target = $region116
              $region121: #{conjugate_transpose_forward.1} parent=113 // loop_exit
                _
            $region114: #{conjugate_transpose_forward.1} parent=105 // pred_fallthru
              _
          $region106: #{conjugate_transpose_forward.1} parent=101 // pred_fallthru
            _
          %478 = vnop
        $region102: #{conjugate_transpose_forward.1} parent=15 // pred_fallthru
          _
      $region16: #{conjugate_transpose_forward.1} parent=5 // pred_fallthru
        _
      %p479 = scmp.le.s32.totalorder 1, %s11
      %p480 = scmp.lt.s32.totalorder %s11, 5
      %p481 = pnand %p479, %p480
      %p482 = pneg %p481
      // Predicated region
      $region140: #{conjugate_transpose_forward.1} parent=5 // pred_check
        _
      $region141: #{conjugate_transpose_forward.1} parent=5 // pred_check_branch
        %484 = sbr.rel (%p481) target = $region143
      $region142: #{conjugate_transpose_forward.1} parent=5 // pred_region
        %s485 = ssub.s32 %s11, 1
        %s486 = sand.u32 %s45, 1
        %s487 = sand.u32 %s45, 1
        %s488 = smul.addr %s487, 16
        %s489 = scalar_lea.vmem [#allocation4], %s488
        // Predicated region
        $region144: #{conjugate_transpose_forward.1} parent=142 // pred_check
          %p490 = pneg %p58
        $region145: #{conjugate_transpose_forward.1} parent=142 // pred_check_branch
          %492 = sbr.rel (%p490) target = $region147
        $region146: #{conjugate_transpose_forward.1} parent=142 // pred_region
          _
        $region147: #{conjugate_transpose_forward.1} parent=142 // pred_fallthru
          _
        %s493 = sand.u32 %s73, 1
        %s494 = sand.u32 %s73, 1
        %s495 = smul.addr %s494, 64
        %s496 = scalar_lea.vmem [#allocation5], %s495
        // Predicated region
        $region148: #{conjugate_transpose_forward.1} parent=142 // pred_check
          %p497 = pneg %p86
        $region149: #{conjugate_transpose_forward.1} parent=142 // pred_check_branch
          %499 = sbr.rel (%p497) target = $region151
        $region150: #{conjugate_transpose_forward.1} parent=142 // pred_region
          _
        $region151: #{conjugate_transpose_forward.1} parent=142 // pred_fallthru
          _
        %s500 = sand.u32 %s101, 1
        %s501 = sand.u32 %s101, 1
        %s502 = smul.addr %s501, 64
        %s503 = scalar_lea.vmem [#allocation6], %s502
        // Predicated region
        $region152: #{conjugate_transpose_forward.1} parent=142 // pred_check
          %p504 = pneg %p114
        $region153: #{conjugate_transpose_forward.1} parent=142 // pred_check_branch
          %506 = sbr.rel (%p504) target = $region155
        $region154: #{conjugate_transpose_forward.1} parent=142 // pred_region
          _
        $region155: #{conjugate_transpose_forward.1} parent=142 // pred_fallthru
          _
        %s507 = sand.u32 %s45, 1
        %s508 = sand.u32 %s45, 1
        %s509 = smul.addr %s508, 16
        %s510 = scalar_lea.vmem [#allocation4], %s509
        %p511 = pneg %p58
        %p512 = pneg %p55
        %s513 = sand.u32 %s73, 1
        %s514 = sand.u32 %s73, 1
        %s515 = smul.addr %s514, 64
        %s516 = scalar_lea.vmem [#allocation5], %s515
        %p517 = pneg %p86
        %p518 = pneg %p83
        %s519 = sand.u32 %s101, 1
        %s520 = sand.u32 %s101, 1
        %s521 = smul.addr %s520, 64
        %s522 = scalar_lea.vmem [#allocation6], %s521
        %p523 = pneg %p114
        %p524 = pneg %p111
        %p525 = pneg %p142
        %p526 = pneg %p139
        %s527 = sand.u32 %s129, 1
        %s528 = sand.u32 %s129, 1
        %s529 = smul.addr %s528, 16
        %s530 = scalar_lea.vmem [#allocation7], %s529
        %p531 = pneg %p170
        %p532 = pneg %p167
        %s533 = sand.u32 %s157, 1
        %s534 = sand.u32 %s157, 1
        %s535 = smul.addr %s534, 16
        %s536 = scalar_lea.vmem [#allocation8], %s535
        %s537 = smul.u32 16, %s23
        %s538 = smul.u32 16, %s23
        %s539 = smul.u32 2, %s21
        %s540 = smul.u32 2, %s21
        %p541 = scmp.eq.s32.totalorder %s23, 0
        // Predicated region
        $region156: #{conjugate_transpose_forward.1} parent=142 // pred_check
          %p542 = pneg %p541
        $region157: #{conjugate_transpose_forward.1} parent=142 // pred_check_branch
          %544 = sbr.rel (%p542) target = $region159
        $region158: #{conjugate_transpose_forward.1} parent=142 // pred_region
          %545 = vst [vmem:[#allocation2] sm:$0xff] 0.0
          %546 = vst [vmem:[#allocation2 + $0x8] sm:$0xff] 0.0
          %547 = vst [vmem:[#allocation2 + $0x10] sm:$0xff] 0.0
          %548 = vst [vmem:[#allocation2 + $0x18] sm:$0xff] 0.0
          %549 = vst [vmem:[#allocation3] sm:$0xff] 0.0
          %550 = vst [vmem:[#allocation3 + $0x8] sm:$0xff] 0.0
          %551 = vst [vmem:[#allocation3 + $0x10] sm:$0xff] 0.0
          %552 = vst [vmem:[#allocation3 + $0x18] sm:$0xff] 0.0
        $region159: #{conjugate_transpose_forward.1} parent=142 // pred_fallthru
          _
        %v553 = vld [vmem:[%s489] sm:$0xf]
        %v554 = vld [vmem:[%s489 + $0x4] sm:$0xf]
        %v555 = vld [vmem:[%s489 + $0x8] sm:$0xf]
        %v556 = vld [vmem:[%s489 + $0xc] sm:$0xf]
        %v557 = vld [vmem:[#allocation2] sm:$0xff]
        %v558 = vld [vmem:[#allocation2 + $0x8] sm:$0xff]
        %v559 = vld [vmem:[#allocation2 + $0x10] sm:$0xff]
        %v560 = vld [vmem:[#allocation2 + $0x18] sm:$0xff]
        %v561 = vld [vmem:[%s496] sm:$0xf]
        %v562 = vld [vmem:[%s496 + $0x4] sm:$0xf]
        %v563 = vld [vmem:[%s496 + $0x8] sm:$0xf]
        %v564 = vld [vmem:[%s496 + $0xc] sm:$0xf]
        %v565 = vld [vmem:[%s496 + $0x10] sm:$0xf]
        %v566 = vld [vmem:[%s496 + $0x14] sm:$0xf]
        %v567 = vld [vmem:[%s496 + $0x18] sm:$0xf]
        %v568 = vld [vmem:[%s496 + $0x1c] sm:$0xf]
        %v569 = vld [vmem:[%s496 + $0x20] sm:$0xf]
        %v570 = vld [vmem:[%s496 + $0x24] sm:$0xf]
        %v571 = vld [vmem:[%s496 + $0x28] sm:$0xf]
        %v572 = vld [vmem:[%s496 + $0x2c] sm:$0xf]
        %v573 = vld [vmem:[%s496 + $0x30] sm:$0xf]
        %v574 = vld [vmem:[%s496 + $0x34] sm:$0xf]
        %v575 = vld [vmem:[%s496 + $0x38] sm:$0xf]
        %v576 = vld [vmem:[%s496 + $0x3c] sm:$0xf]
        %v581 = vunpack.c.l.b16 %v553
        %v582 = vunpack.c.l.b16 %v554
        %v583 = vunpack.c.l.b16 %v555
        %v584 = vunpack.c.l.b16 %v556
        %v585 = vpack.c.b16 %v582, %v581
        %v586 = vpack.c.b16 %v584, %v583
        %v605 = vunpack.c.l.b16 %v561
        %v606 = vunpack.c.l.b16 %v562
        %v607 = vunpack.c.l.b16 %v563
        %v608 = vunpack.c.l.b16 %v564
        %v609 = vunpack.c.l.b16 %v565
        %v610 = vunpack.c.l.b16 %v566
        %v611 = vunpack.c.l.b16 %v567
        %v612 = vunpack.c.l.b16 %v568
        %v613 = vunpack.c.l.b16 %v569
        %v614 = vunpack.c.l.b16 %v570
        %v615 = vunpack.c.l.b16 %v571
        %v616 = vunpack.c.l.b16 %v572
        %v617 = vunpack.c.l.b16 %v573
        %v618 = vunpack.c.l.b16 %v574
        %v619 = vunpack.c.l.b16 %v575
        %v620 = vunpack.c.l.b16 %v576
        %v621 = vpack.c.b16 %v606, %v605
        %v622 = vpack.c.b16 %v608, %v607
        %v623 = vpack.c.b16 %v610, %v609
        %v624 = vpack.c.b16 %v612, %v611
        %v625 = vpack.c.b16 %v614, %v613
        %v626 = vpack.c.b16 %v616, %v615
        %v627 = vpack.c.b16 %v618, %v617
        %v628 = vpack.c.b16 %v620, %v619
        %637 = vmatpush.bf16.msra.mxu0 %v628
        %638 = vmatpush.bf16.msra.mxu0 %v627
        %639 = vmatpush.bf16.msra.mxu0 %v626
        %640 = vmatpush.bf16.msra.mxu0 %v625
        %641 = vmatpush.bf16.msra.mxu0 %v624
        %642 = vmatpush.bf16.msra.mxu0 %v623
        %643 = vmatpush.bf16.msra.mxu0 %v622
        %644 = vmatpush.bf16.msra.mxu0 %v621
        %645 = vmatmul.bf16.gmra.mxu0 %v585
        %v646 = vpop.f32.mrf.mxu0
        %v647 = vadd.f32 0.0, %v646
        %v648 = vpop.f32.mrf.mxu0
        %v649 = vadd.f32 0.0, %v648
        %650 = vmatmul.bf16.gmra.mxu0 %v586
        %v651 = vpop.f32.mrf.mxu0
        %v652 = vadd.f32 0.0, %v651
        %v653 = vpop.f32.mrf.mxu0
        %v654 = vadd.f32 0.0, %v653
        %655 = vdwg.mxu0
        %v656 = vadd.f32 %v557, %v647
        %v657 = vadd.f32 %v558, %v649
        %v658 = vadd.f32 %v559, %v652
        %v659 = vadd.f32 %v560, %v654
        %660 = vst [vmem:[#allocation2] sm:$0xff] %v656
        %661 = vst [vmem:[#allocation2 + $0x8] sm:$0xff] %v657
        %662 = vst [vmem:[#allocation2 + $0x10] sm:$0xff] %v658
        %663 = vst [vmem:[#allocation2 + $0x18] sm:$0xff] %v659
        %v664 = vld [vmem:[#allocation3] sm:$0xff]
        %v665 = vld [vmem:[#allocation3 + $0x8] sm:$0xff]
        %v666 = vld [vmem:[#allocation3 + $0x10] sm:$0xff]
        %v667 = vld [vmem:[#allocation3 + $0x18] sm:$0xff]
        %v668 = vld [vmem:[%s503] sm:$0xf]
        %v669 = vld [vmem:[%s503 + $0x4] sm:$0xf]
        %v670 = vld [vmem:[%s503 + $0x8] sm:$0xf]
        %v671 = vld [vmem:[%s503 + $0xc] sm:$0xf]
        %v672 = vld [vmem:[%s503 + $0x10] sm:$0xf]
        %v673 = vld [vmem:[%s503 + $0x14] sm:$0xf]
        %v674 = vld [vmem:[%s503 + $0x18] sm:$0xf]
        %v675 = vld [vmem:[%s503 + $0x1c] sm:$0xf]
        %v676 = vld [vmem:[%s503 + $0x20] sm:$0xf]
        %v677 = vld [vmem:[%s503 + $0x24] sm:$0xf]
        %v678 = vld [vmem:[%s503 + $0x28] sm:$0xf]
        %v679 = vld [vmem:[%s503 + $0x2c] sm:$0xf]
        %v680 = vld [vmem:[%s503 + $0x30] sm:$0xf]
        %v681 = vld [vmem:[%s503 + $0x34] sm:$0xf]
        %v682 = vld [vmem:[%s503 + $0x38] sm:$0xf]
        %v683 = vld [vmem:[%s503 + $0x3c] sm:$0xf]
        %v700 = vunpack.c.l.b16 %v668
        %v701 = vunpack.c.l.b16 %v669
        %v702 = vunpack.c.l.b16 %v670
        %v703 = vunpack.c.l.b16 %v671
        %v704 = vunpack.c.l.b16 %v672
        %v705 = vunpack.c.l.b16 %v673
        %v706 = vunpack.c.l.b16 %v674
        %v707 = vunpack.c.l.b16 %v675
        %v708 = vunpack.c.l.b16 %v676
        %v709 = vunpack.c.l.b16 %v677
        %v710 = vunpack.c.l.b16 %v678
        %v711 = vunpack.c.l.b16 %v679
        %v712 = vunpack.c.l.b16 %v680
        %v713 = vunpack.c.l.b16 %v681
        %v714 = vunpack.c.l.b16 %v682
        %v715 = vunpack.c.l.b16 %v683
        %v716 = vpack.c.b16 %v701, %v700
        %v717 = vpack.c.b16 %v703, %v702
        %v718 = vpack.c.b16 %v705, %v704
        %v719 = vpack.c.b16 %v707, %v706
        %v720 = vpack.c.b16 %v709, %v708
        %v721 = vpack.c.b16 %v711, %v710
        %v722 = vpack.c.b16 %v713, %v712
        %v723 = vpack.c.b16 %v715, %v714
        %732 = vmatpush.bf16.msra.mxu0 %v723
        %733 = vmatpush.bf16.msra.mxu0 %v722
        %734 = vmatpush.bf16.msra.mxu0 %v721
        %735 = vmatpush.bf16.msra.mxu0 %v720
        %736 = vmatpush.bf16.msra.mxu0 %v719
        %737 = vmatpush.bf16.msra.mxu0 %v718
        %738 = vmatpush.bf16.msra.mxu0 %v717
        %739 = vmatpush.bf16.msra.mxu0 %v716
        %740 = vmatmul.bf16.gmra.mxu0 %v585
        %v741 = vpop.f32.mrf.mxu0
        %v742 = vadd.f32 0.0, %v741
        %v743 = vpop.f32.mrf.mxu0
        %v744 = vadd.f32 0.0, %v743
        %745 = vmatmul.bf16.gmra.mxu0 %v586
        %v746 = vpop.f32.mrf.mxu0
        %v747 = vadd.f32 0.0, %v746
        %v748 = vpop.f32.mrf.mxu0
        %v749 = vadd.f32 0.0, %v748
        %750 = vdwg.mxu0
        %v751 = vadd.f32 %v664, %v742
        %v752 = vadd.f32 %v665, %v744
        %v753 = vadd.f32 %v666, %v747
        %v754 = vadd.f32 %v667, %v749
        %755 = vst [vmem:[#allocation3] sm:$0xff] %v751
        %756 = vst [vmem:[#allocation3 + $0x8] sm:$0xff] %v752
        %757 = vst [vmem:[#allocation3 + $0x10] sm:$0xff] %v753
        %758 = vst [vmem:[#allocation3 + $0x18] sm:$0xff] %v754
        %p759 = scmp.eq.s32.totalorder %s23, 1
        // Predicated region
        $region160: #{conjugate_transpose_forward.1} parent=142 // pred_check
          %p760 = pneg %p759
        $region161: #{conjugate_transpose_forward.1} parent=142 // pred_check_branch
          %762 = sbr.rel (%p760) target = $region163
        $region162: #{conjugate_transpose_forward.1} parent=142 // pred_region
          %v763 = vld [vmem:[#allocation2] sm:$0xff]
          %v764 = vld [vmem:[#allocation2 + $0x8] sm:$0xff]
          %v765 = vld [vmem:[#allocation2 + $0x10] sm:$0xff]
          %v766 = vld [vmem:[#allocation2 + $0x18] sm:$0xff]
          %v767 = vld [vmem:[#allocation3] sm:$0xff]
          %v768 = vld [vmem:[#allocation3 + $0x8] sm:$0xff]
          %v769 = vld [vmem:[#allocation3 + $0x10] sm:$0xff]
          %v770 = vld [vmem:[#allocation3 + $0x18] sm:$0xff]
          %v771 = vadd.f32 %v763, %v769
          %v772 = vadd.f32 %v764, %v770
          %773 = vst [vmem:[%s530] sm:$0xff] %v771
          %774 = vst [vmem:[%s530 + $0x8] sm:$0xff] %v772
          %v775 = vsub.f32 %v765, %v767
          %v776 = vsub.f32 %v766, %v768
          %777 = vst [vmem:[%s536] sm:$0xff] %v775
          %778 = vst [vmem:[%s536 + $0x8] sm:$0xff] %v776
        $region163: #{conjugate_transpose_forward.1} parent=142 // pred_fallthru
          _
        %s779 = sand.u32 %s129, 1
        %s780 = sand.u32 %s129, 1
        %s781 = smul.addr %s780, 16
        %s782 = scalar_lea.vmem [#allocation7], %s781
        %s783 = sand.u32 %s157, 1
        %s784 = sand.u32 %s157, 1
        %s785 = smul.addr %s784, 16
        %s786 = scalar_lea.vmem [#allocation8], %s785
        // Predicated region
        $region164: #{conjugate_transpose_forward.1} parent=142 // pred_check
          %p787 = pneg %p139
        $region165: #{conjugate_transpose_forward.1} parent=142 // pred_check_branch
          %789 = sbr.rel (%p787) target = $region167
        $region166: #{conjugate_transpose_forward.1} parent=142 // pred_region
          %s790 = smul.u32 2, %s21
          %s791 = smul.addr %s790, 2
          %s792 = sadd.s32 %s22, %s791
          %s793 = smul.addr %s792, 8
          %s794 = scalar_lea.vmem %s3, %s793
          // Predicated region
          $region168: #{conjugate_transpose_forward.1} parent=166 // pred_check
            _
          $region169: #{conjugate_transpose_forward.1} parent=166 // pred_check_branch
            %796 = sbr.rel (0) target = $region171
          $region170: #{conjugate_transpose_forward.1} parent=166 // pred_region
            // Predicated region
            $region172: #{conjugate_transpose_forward.1} parent=170 // pred_check
              _
            $region173: #{conjugate_transpose_forward.1} parent=170 // pred_check_branch
              %798 = sbr.rel (0) target = $region175
            $region174: #{conjugate_transpose_forward.1} parent=170 // pred_region
              // Predicated region
              $region187: #{conjugate_transpose_forward.1} parent=174 // pred_check
                _
              $region188: #{conjugate_transpose_forward.1} parent=174 // pred_check_branch
                %816 = sbr.rel (0) target = $region190
              $region189: #{conjugate_transpose_forward.1} parent=174 // pred_region
                loop: start=0, step=1, limit=1
                $region191: #{conjugate_transpose_forward.1} parent=189 // loop_pre_header
                  _
                $region192: #{conjugate_transpose_forward.1} parent=189 // loop_header
                  %s818 = sphi 0, %s822
                  %p819 = scmp.ge.s32.totalorder %s818, 1
                  %s823 = sphi %s782, %s782
                  %s824 = sphi %s794, %s794
                $region193: #{conjugate_transpose_forward.1} parent=189 // loop_header_branch
                  %821 = sbr.rel (%p819) target = $region197
                $region194: #{conjugate_transpose_forward.1} parent=189 // loop_body
                  %v825 = vld [vmem:[%s823] sm:$0xff]
                  %826 = vst [vmem:[%s824] sm:$0xff] %v825
                  %v827 = vld [vmem:[%s823 + $0x8] sm:$0xff]
                  %828 = vst [vmem:[%s824 + $0x10] sm:$0xff] %v827
                $region195: #{conjugate_transpose_forward.1} parent=189 // loop_footer
                  %s822 = sadd.s32 1, %s818
                $region196: #{conjugate_transpose_forward.1} parent=189 // loop_footer_branch
                  %817 = sbr.rel target = $region192
                $region197: #{conjugate_transpose_forward.1} parent=189 // loop_exit
                  _
              $region190: #{conjugate_transpose_forward.1} parent=174 // pred_fallthru
                _
              // Predicated region
              $region198: #{conjugate_transpose_forward.1} parent=174 // pred_check
                _
              $region199: #{conjugate_transpose_forward.1} parent=174 // pred_check_branch
                %830 = sbr.rel target = $region201
              $region200: #{conjugate_transpose_forward.1} parent=174 // pred_region
                _
              $region201: #{conjugate_transpose_forward.1} parent=174 // pred_fallthru
                _
            $region175: #{conjugate_transpose_forward.1} parent=170 // pred_fallthru
              _
            // Predicated region
            $region176: #{conjugate_transpose_forward.1} parent=170 // pred_check
              _
            $region177: #{conjugate_transpose_forward.1} parent=170 // pred_check_branch
              %800 = sbr.rel target = $region179
            $region178: #{conjugate_transpose_forward.1} parent=170 // pred_region
              %s802 = ssub.s32 256, 1
              loop: start=0, step=1, limit=1
              $region180: #{conjugate_transpose_forward.1} parent=178 // loop_pre_header
                _
              $region181: #{conjugate_transpose_forward.1} parent=178 // loop_header
                %s804 = sphi 0, %s808
                %p805 = scmp.ge.s32.totalorder %s804, 1
                %s809 = sphi %s782, %s782
                %s810 = sphi %s794, %s794
              $region182: #{conjugate_transpose_forward.1} parent=178 // loop_header_branch
                %807 = sbr.rel (%p805) target = $region186
              $region183: #{conjugate_transpose_forward.1} parent=178 // loop_body
                %v811 = vld [vmem:[%s809] sm:%s802]
                %812 = vst [vmem:[%s810] sm:%s802] %v811
                %v813 = vld [vmem:[%s809 + $0x8] sm:%s802]
                %814 = vst [vmem:[%s810 + $0x10] sm:%s802] %v813
              $region184: #{conjugate_transpose_forward.1} parent=178 // loop_footer
                %s808 = sadd.s32 1, %s804
              $region185: #{conjugate_transpose_forward.1} parent=178 // loop_footer_branch
                %803 = sbr.rel target = $region181
              $region186: #{conjugate_transpose_forward.1} parent=178 // loop_exit
                _
            $region179: #{conjugate_transpose_forward.1} parent=170 // pred_fallthru
              _
          $region171: #{conjugate_transpose_forward.1} parent=166 // pred_fallthru
            _
          %831 = vnop
        $region167: #{conjugate_transpose_forward.1} parent=142 // pred_fallthru
          _
        // Predicated region
        $region202: #{conjugate_transpose_forward.1} parent=142 // pred_check
          %p832 = pneg %p167
        $region203: #{conjugate_transpose_forward.1} parent=142 // pred_check_branch
          %834 = sbr.rel (%p832) target = $region205
        $region204: #{conjugate_transpose_forward.1} parent=142 // pred_region
          %s835 = smul.u32 2, %s21
          %s836 = smul.addr %s835, 2
          %s837 = sadd.s32 %s22, %s836
          %s838 = smul.addr %s837, 8
          %s839 = scalar_lea.vmem %s4, %s838
          // Predicated region
          $region206: #{conjugate_transpose_forward.1} parent=204 // pred_check
            _
          $region207: #{conjugate_transpose_forward.1} parent=204 // pred_check_branch
            %841 = sbr.rel (0) target = $region209
          $region208: #{conjugate_transpose_forward.1} parent=204 // pred_region
            // Predicated region
            $region210: #{conjugate_transpose_forward.1} parent=208 // pred_check
              _
            $region211: #{conjugate_transpose_forward.1} parent=208 // pred_check_branch
              %843 = sbr.rel (0) target = $region213
            $region212: #{conjugate_transpose_forward.1} parent=208 // pred_region
              // Predicated region
              $region225: #{conjugate_transpose_forward.1} parent=212 // pred_check
                _
              $region226: #{conjugate_transpose_forward.1} parent=212 // pred_check_branch
                %861 = sbr.rel (0) target = $region228
              $region227: #{conjugate_transpose_forward.1} parent=212 // pred_region
                loop: start=0, step=1, limit=1
                $region229: #{conjugate_transpose_forward.1} parent=227 // loop_pre_header
                  _
                $region230: #{conjugate_transpose_forward.1} parent=227 // loop_header
                  %s863 = sphi 0, %s867
                  %p864 = scmp.ge.s32.totalorder %s863, 1
                  %s868 = sphi %s786, %s786
                  %s869 = sphi %s839, %s839
                $region231: #{conjugate_transpose_forward.1} parent=227 // loop_header_branch
                  %866 = sbr.rel (%p864) target = $region235
                $region232: #{conjugate_transpose_forward.1} parent=227 // loop_body
                  %v870 = vld [vmem:[%s868] sm:$0xff]
                  %871 = vst [vmem:[%s869] sm:$0xff] %v870
                  %v872 = vld [vmem:[%s868 + $0x8] sm:$0xff]
                  %873 = vst [vmem:[%s869 + $0x10] sm:$0xff] %v872
                $region233: #{conjugate_transpose_forward.1} parent=227 // loop_footer
                  %s867 = sadd.s32 1, %s863
                $region234: #{conjugate_transpose_forward.1} parent=227 // loop_footer_branch
                  %862 = sbr.rel target = $region230
                $region235: #{conjugate_transpose_forward.1} parent=227 // loop_exit
                  _
              $region228: #{conjugate_transpose_forward.1} parent=212 // pred_fallthru
                _
              // Predicated region
              $region236: #{conjugate_transpose_forward.1} parent=212 // pred_check
                _
              $region237: #{conjugate_transpose_forward.1} parent=212 // pred_check_branch
                %875 = sbr.rel target = $region239
              $region238: #{conjugate_transpose_forward.1} parent=212 // pred_region
                _
              $region239: #{conjugate_transpose_forward.1} parent=212 // pred_fallthru
                _
            $region213: #{conjugate_transpose_forward.1} parent=208 // pred_fallthru
              _
            // Predicated region
            $region214: #{conjugate_transpose_forward.1} parent=208 // pred_check
              _
            $region215: #{conjugate_transpose_forward.1} parent=208 // pred_check_branch
              %845 = sbr.rel target = $region217
            $region216: #{conjugate_transpose_forward.1} parent=208 // pred_region
              %s847 = ssub.s32 256, 1
              loop: start=0, step=1, limit=1
              $region218: #{conjugate_transpose_forward.1} parent=216 // loop_pre_header
                _
              $region219: #{conjugate_transpose_forward.1} parent=216 // loop_header
                %s849 = sphi 0, %s853
                %p850 = scmp.ge.s32.totalorder %s849, 1
                %s854 = sphi %s786, %s786
                %s855 = sphi %s839, %s839
              $region220: #{conjugate_transpose_forward.1} parent=216 // loop_header_branch
                %852 = sbr.rel (%p850) target = $region224
              $region221: #{conjugate_transpose_forward.1} parent=216 // loop_body
                %v856 = vld [vmem:[%s854] sm:%s847]
                %857 = vst [vmem:[%s855] sm:%s847] %v856
                %v858 = vld [vmem:[%s854 + $0x8] sm:%s847]
                %859 = vst [vmem:[%s855 + $0x10] sm:%s847] %v858
              $region222: #{conjugate_transpose_forward.1} parent=216 // loop_footer
                %s853 = sadd.s32 1, %s849
              $region223: #{conjugate_transpose_forward.1} parent=216 // loop_footer_branch
                %848 = sbr.rel target = $region219
              $region224: #{conjugate_transpose_forward.1} parent=216 // loop_exit
                _
            $region217: #{conjugate_transpose_forward.1} parent=208 // pred_fallthru
              _
          $region209: #{conjugate_transpose_forward.1} parent=204 // pred_fallthru
            _
          %876 = vnop
        $region205: #{conjugate_transpose_forward.1} parent=142 // pred_fallthru
          _
      $region143: #{conjugate_transpose_forward.1} parent=5 // pred_fallthru
        _
      %p877 = scmp.le.s32.totalorder 2, %s11
      // Predicated region
      $region240: #{conjugate_transpose_forward.1} parent=5 // pred_check
        %p878 = pneg %p877
      $region241: #{conjugate_transpose_forward.1} parent=5 // pred_check_branch
        %880 = sbr.rel (%p878) target = $region243
      $region242: #{conjugate_transpose_forward.1} parent=5 // pred_region
        %s881 = ssub.s32 %s11, 2
        // Predicated region
        $region244: #{conjugate_transpose_forward.1} parent=242 // pred_check
          %p882 = pneg %p145
        $region245: #{conjugate_transpose_forward.1} parent=242 // pred_check_branch
          %884 = sbr.rel (%p882) target = $region247
        $region246: #{conjugate_transpose_forward.1} parent=242 // pred_region
          %s885 = sand.u32 %s130, 1
          %s886 = sand.u32 %s130, 1
          %s887 = smul.addr %s886, 16
          %s888 = scalar_lea.vmem [#allocation7], %s887
        $region247: #{conjugate_transpose_forward.1} parent=242 // pred_fallthru
          _
        // Predicated region
        $region248: #{conjugate_transpose_forward.1} parent=242 // pred_check
          %p889 = pneg %p173
        $region249: #{conjugate_transpose_forward.1} parent=242 // pred_check_branch
          %891 = sbr.rel (%p889) target = $region251
        $region250: #{conjugate_transpose_forward.1} parent=242 // pred_region
          %s892 = sand.u32 %s158, 1
          %s893 = sand.u32 %s158, 1
          %s894 = smul.addr %s893, 16
          %s895 = scalar_lea.vmem [#allocation8], %s894
        $region251: #{conjugate_transpose_forward.1} parent=242 // pred_fallthru
          _
      $region243: #{conjugate_transpose_forward.1} parent=5 // pred_fallthru
        _
    $region6: #{conjugate_transpose_forward.1} parent=1 // loop_footer
      %s15 = sadd.s32 1, %s11
    $region7: #{conjugate_transpose_forward.1} parent=1 // loop_footer_branch
      %10 = sbr.rel target = $region3
    $region8: #{conjugate_transpose_forward.1} parent=1 // loop_exit
      _

</llo_original>
